<compile_context>
chip_gen: v5e
topology: v5e:2x2
jax: 0.10.0
libtpu: 0.0.40
codegen_flags: <defaults>
</compile_context>

<pallas_src>
import math

import jax
import jax.numpy as jnp
from jax.experimental import pallas as pl
from jax.experimental.pallas import tpu as pltpu


def _round_up(x, m):
    return ((x + m - 1) // m) * m


# ---------------------------------------------------------------------------
# Parameter packing: all weights -> one bf16 buffer, all biases -> one f32 buf
# ---------------------------------------------------------------------------
def pack_vpg_params(params, *, obs_pad_min=16):
    """params: list of (W [in, out] f32, b [out] f32).

    Returns a dict with:
      wp         : [R, C] bf16  packed weights (one tile-aligned row block per layer)
      bp         : [8, C] f32   packed biases (row l = bias of layer l, zero padded)
      layer_meta : tuple of (row_offset, n_rows, n_cols) per layer (static)
      obs_pad, out_cols, obs_dim, act2
    """
    n_layers = len(params)
    obs_dim = params[0][0].shape[0]
    act2 = params[-1][0].shape[1]

    # Padded output width of each layer (lane multiple of 128).
    out_pads = [_round_up(w.shape[1], 128) for w, _ in params]
    # Padded input width of each layer: layer 0 -> obs padded to a bf16 sublane
    # tile (16 rows); layer l>0 -> previous layer's padded output width.
    obs_pad = _round_up(max(obs_dim, obs_pad_min), 16)
    in_pads = [obs_pad] + out_pads[:-1]

    total_rows = sum(in_pads)           # 16 + 256 + 512 + 256 = 1040 for defaults
    n_cols = max(out_pads)              # 512 for defaults

    wp = jnp.zeros((total_rows, n_cols), jnp.float32)
    bp = jnp.zeros((_round_up(n_layers, 8), n_cols), jnp.float32)
    layer_meta = []
    r0 = 0
    for l, (w, b) in enumerate(params):
        kin, kout = w.shape
        wp = wp.at[r0:r0 + kin, 0:kout].set(w.astype(jnp.float32))
        bp = bp.at[l, 0:kout].set(jnp.reshape(b, (-1,)).astype(jnp.float32))
        layer_meta.append((r0, in_pads[l], out_pads[l]))
        r0 += in_pads[l]

    return dict(
        wp=wp.astype(jnp.bfloat16),
        bp=bp,
        layer_meta=tuple(layer_meta),
        obs_pad=obs_pad,
        out_cols=out_pads[-1],
        obs_dim=obs_dim,
        act2=act2,
    )


# ---------------------------------------------------------------------------
# Kernel: fused Linear+ReLU x3 + final Linear over one packed weight buffer
# ---------------------------------------------------------------------------
def _make_kernel(layer_meta):
    n_layers = len(layer_meta)

    def kernel(x_ref, wp_ref, bp_ref, out_ref):
        bp = bp_ref[...]                                  # (8, C) f32, VMEM-resident
        h = x_ref[...].astype(jnp.bfloat16)               # (tm, obs_pad)
        for l, (r0, nrows, ncols) in enumerate(layer_meta):
            # Static, tile-aligned slice of the packed bf16 weight buffer.
            w = wp_ref[r0:r0 + nrows, 0:ncols]
            z = jnp.dot(h, w, preferred_element_type=jnp.float32)  # MXU, f32 acc
            z = z + bp[l:l + 1, 0:ncols]                  # bias add on the f32 VPU path
            if l < n_layers - 1:
                h = jnp.maximum(z, 0.0).astype(jnp.bfloat16)
            else:
                out_ref[...] = z.astype(out_ref.dtype)    # lane-dense 128-wide store

    return kernel


# ---------------------------------------------------------------------------
# Batch-tile selection
# ---------------------------------------------------------------------------
def _choose_tile(B, *, max_tm=2048):
    """Small batches: one minimally-padded tile.  Large batches: minimise padding
    waste first (multiples of 8 up to max_tm), prefer MXU-friendly 256-multiples
    as a tiebreak, and keep >= 2 grid steps so both v7x TensorCores get work."""
    b8 = _round_up(max(B, 1), 8)
    if b8 <= 512:
        return b8
    best_tm, best_key = None, None
    for tm in range(256, max_tm + 1, 8):
        steps = -(-b8 // tm)
        if steps < 2:
            continue
        pad = steps * tm - B
        mxu = 0 if tm % 256 == 0 else (1 if tm % 128 == 0 else 2)
        key = (pad, mxu, -tm)
        if best_key is None or key < best_key:
            best_key, best_tm = key, tm
    if best_tm is None:
        best_tm = min(b8, max_tm)
    return best_tm


# ---------------------------------------------------------------------------
# Forward pass
# ---------------------------------------------------------------------------
def vpg_forward(x, packed, *, max_tm=2048, vmem_limit_bytes=32 * 1024 * 1024):
    """x: [B, obs_dim] f32; packed: output of pack_vpg_params()."""
    B, obs_dim = x.shape
    assert obs_dim == packed["obs_dim"], (obs_dim, packed["obs_dim"])
    obs_pad = packed["obs_pad"]
    out_cols = packed["out_cols"]
    act2 = packed["act2"]
    layer_meta = packed["layer_meta"]
    wp, bp = packed["wp"], packed["bp"]

    tm = _choose_tile(B, max_tm=max_tm)
    b_pad = _round_up(B, tm)
    grid = (b_pad // tm,)

    x_p = jnp.pad(x.astype(jnp.float32),
                  ((0, b_pad - B), (0, obs_pad - obs_dim)))

    flops = sum(2 * b_pad * nrows * ncols for _, nrows, ncols in layer_meta)
    bytes_accessed = (wp.size * 2 + bp.size * 4
                      + x_p.size * 4 + b_pad * out_cols * 4)

    out = pl.pallas_call(
        _make_kernel(layer_meta),
        out_shape=jax.ShapeDtypeStruct((b_pad, out_cols), jnp.float32),
        grid=grid,
        in_specs=[
            pl.BlockSpec((tm, obs_pad), lambda i: (i, 0)),
            # Constant index maps: packed weights / biases stay resident in VMEM
            # across batch tiles (not re-DMA'd per grid step).
            pl.BlockSpec(wp.shape, lambda i: (0, 0)),
            pl.BlockSpec(bp.shape, lambda i: (0, 0)),
        ],
        out_specs=pl.BlockSpec((tm, out_cols), lambda i: (i, 0)),
        compiler_params=pltpu.CompilerParams(
            dimension_semantics=("parallel",),
            vmem_limit_bytes=vmem_limit_bytes,
        ),
        cost_estimate=pl.CostEstimate(
            flops=flops, transcendentals=0, bytes_accessed=bytes_accessed),
    )(x_p, wp, bp)

    return out[:B, :act2]


# ---------------------------------------------------------------------------
# Init (matches PyTorch: xavier_normal_ weights, zero biases) and reference
# ---------------------------------------------------------------------------
def init_vpg_params(key, obs_dim=6, act_dim=2, hl=(256, 512, 256)):
    dims = [obs_dim, *hl, act_dim * 2]
    params = []
    for i in range(len(dims) - 1):
        fan_in, fan_out = dims[i], dims[i + 1]
        key, sub = jax.random.split(key)
        std = math.sqrt(2.0 / (fan_in + fan_out))
        w = std * jax.random.normal(sub, (fan_in, fan_out), dtype=jnp.float32)
        b = jnp.zeros((fan_out,), dtype=jnp.float32)
        params.append((w, b))
    return params


def vpg_reference(x, params, *, bf16_matmul=True):
    """Plain-JAX reference; bf16_matmul=True mirrors the kernel's MXU dtype."""
    h = x
    n = len(params)
    for i, (w, b) in enumerate(params):
        if bf16_matmul:
            z = jnp.dot(h.astype(jnp.bfloat16), w.astype(jnp.bfloat16),
                        preferred_element_type=jnp.float32) + jnp.reshape(b, (1, -1))
        else:
            z = h @ w + jnp.reshape(b, (1, -1))
        h = jnp.maximum(z, 0.0) if i < n - 1 else z
    return h


if __name__ == "__main__":
    key = jax.random.PRNGKey(0)
    pkey, k1, k2, k3 = jax.random.split(key, 4)

    obs_dim, act_dim = 6, 2
    params = init_vpg_params(pkey, obs_dim=obs_dim, act_dim=act_dim)
    packed = pack_vpg_params(params)

    fwd = jax.jit(lambda x: vpg_forward(x, packed))

    # 1) Small batch (rollout / latency path): single 8-row tile, 3 input DMAs.
    x_small = jax.random.normal(k1, (8, obs_dim), dtype=jnp.float32)
    out_small = jax.block_until_ready(fwd(x_small))
    ref_small = vpg_reference(x_small, params)
    assert out_small.shape == (8, act_dim * 2), out_small.shape
    err = float(jnp.max(jnp.abs(out_small - ref_small)))
    assert jnp.allclose(out_small, ref_small, atol=1e-2, rtol=1e-2), err

    # 2) Medium batch (B=384): single 384-row tile, zero padded rows (was 33% waste).
    x_mid = jax.random.normal(k2, (384, obs_dim), dtype=jnp.float32)
    out_mid = jax.block_until_ready(fwd(x_mid))
    ref_mid = vpg_reference(x_mid, params)
    assert out_mid.shape == (384, act_dim * 2), out_mid.shape
    err = float(jnp.max(jnp.abs(out_mid - ref_mid)))
    assert jnp.allclose(out_mid, ref_mid, atol=1e-2, rtol=1e-2), err

    # 3) Large batch (B=3072): TM=1536, grid=(2,) -> zero padding, both v7x TCs busy.
    x_big = jax.random.normal(k3, (3072, obs_dim), dtype=jnp.float32)
    out_big = jax.block_until_ready(fwd(x_big))
    ref_big = vpg_reference(x_big, params)
    assert out_big.shape == (3072, act_dim * 2), out_big.shape
    err = float(jnp.max(jnp.abs(out_big - ref_big)))
    assert jnp.allclose(out_big, ref_big, atol=1e-2, rtol=1e-2), err

    # Semantics vs full-f32 PyTorch math (difference is bf16-MXU noise only).
    ref_f32 = vpg_reference(x_big, params, bf16_matmul=False)
    assert jnp.allclose(out_big, ref_f32, atol=1e-1, rtol=1e-1)

    # 4) Bias-path coverage (PyTorch inits biases to 0, which would hide a missing
    #    bias add): rebuild with random biases and re-check.
    params_rb = [(w, 0.1 * jax.random.normal(jax.random.fold_in(pkey, i),
                                             (w.shape[1],), dtype=jnp.float32))
                 for i, (w, _) in enumerate(params)]
    packed_rb = pack_vpg_params(params_rb)
    x_rb = jax.random.normal(jax.random.fold_in(pkey, 99), (64, obs_dim),
                             dtype=jnp.float32)
    out_rb = jax.block_until_ready(jax.jit(lambda x: vpg_forward(x, packed_rb))(x_rb))
    ref_rb = vpg_reference(x_rb, params_rb)
    err = float(jnp.max(jnp.abs(out_rb - ref_rb)))
    assert jnp.allclose(out_rb, ref_rb, atol=1e-2, rtol=1e-2), err

    print("KERNEL_OK")
</pallas_src>

<mosaic_0001>
module attributes {stable_mosaic.version = 11 : i64} {
  func.func @kernel(%arg0: i32, %arg1: memref<8x16xf32, #tpu.memory_space<vmem>>, %arg2: memref<1040x512xbf16, #tpu.memory_space<vmem>>, %arg3: memref<8x512xf32, #tpu.memory_space<vmem>>, %arg4: memref<8x128xf32, #tpu.memory_space<vmem>>) attributes {dimension_semantics = [#tpu.dimension_semantics<parallel>], iteration_bounds = array<i64: 1>, scalar_prefetch = 0 : i64, scratch_operands = 0 : i64, tpu.core_type = #tpu.core_type<tc>, window_params = [{transform_indices = @transform_0, window_bounds = array<i64: 8, 16>}, {pipeline_mode = #tpu.pipeline_mode<synchronous>, transform_indices = @transform_1, window_bounds = array<i64: 1040, 512>}, {pipeline_mode = #tpu.pipeline_mode<synchronous>, transform_indices = @transform_2, window_bounds = array<i64: 8, 512>}, {transform_indices = @transform_3, window_bounds = array<i64: 8, 128>}]} {
    %c0 = arith.constant 0 : index
    %c0_0 = arith.constant 0 : index
    %0 = vector.load %arg3[%c0, %c0_0] : memref<8x512xf32, #tpu.memory_space<vmem>>, vector<8x512xf32>
    %c0_1 = arith.constant 0 : index
    %c0_2 = arith.constant 0 : index
    %1 = vector.load %arg1[%c0_1, %c0_2] : memref<8x16xf32, #tpu.memory_space<vmem>>, vector<8x16xf32>
    %2 = arith.truncf %1 : vector<8x16xf32> to vector<8x16xbf16>
    %c0_3 = arith.constant 0 : index
    %c0_4 = arith.constant 0 : index
    %3 = vector.load %arg2[%c0_3, %c0_4] : memref<1040x512xbf16, #tpu.memory_space<vmem>>, vector<16x256xbf16>
    %cst = arith.constant dense<0.000000e+00> : vector<8x256xf32>
    %4 = tpu.matmul %2, %3, %cst {dimension_numbers = #tpu.dot_dimension_numbers<[1], [0], [0], [1], [0, 0, 1, 1], [], []>} : vector<8x16xbf16>, vector<16x256xbf16>, vector<8x256xf32> -> vector<8x256xf32>
    %5 = vector.extract_strided_slice %0 {offsets = [0, 0], sizes = [1, 256], strides = [1, 1]} : vector<8x512xf32> to vector<1x256xf32>
    %6 = vector.broadcast %5 : vector<1x256xf32> to vector<8x256xf32>
    %7 = arith.addf %4, %6 : vector<8x256xf32>
    %cst_5 = arith.constant 0.000000e+00 : f32
    %8 = vector.broadcast %cst_5 : f32 to vector<8x256xf32>
    %9 = arith.maximumf %7, %8 : vector<8x256xf32>
    %10 = arith.truncf %9 : vector<8x256xf32> to vector<8x256xbf16>
    %c16 = arith.constant 16 : index
    %c0_6 = arith.constant 0 : index
    %11 = vector.load %arg2[%c16, %c0_6] : memref<1040x512xbf16, #tpu.memory_space<vmem>>, vector<256x512xbf16>
    %cst_7 = arith.constant dense<0.000000e+00> : vector<8x512xf32>
    %12 = tpu.matmul %10, %11, %cst_7 {dimension_numbers = #tpu.dot_dimension_numbers<[1], [0], [0], [1], [0, 0, 1, 1], [], []>} : vector<8x256xbf16>, vector<256x512xbf16>, vector<8x512xf32> -> vector<8x512xf32>
    %13 = vector.extract_strided_slice %0 {offsets = [1, 0], sizes = [1, 512], strides = [1, 1]} : vector<8x512xf32> to vector<1x512xf32>
    %14 = vector.broadcast %13 : vector<1x512xf32> to vector<8x512xf32>
    %15 = arith.addf %12, %14 : vector<8x512xf32>
    %cst_8 = arith.constant 0.000000e+00 : f32
    %16 = vector.broadcast %cst_8 : f32 to vector<8x512xf32>
    %17 = arith.maximumf %15, %16 : vector<8x512xf32>
    %18 = arith.truncf %17 : vector<8x512xf32> to vector<8x512xbf16>
    %c272 = arith.constant 272 : index
    %c0_9 = arith.constant 0 : index
    %19 = vector.load %arg2[%c272, %c0_9] : memref<1040x512xbf16, #tpu.memory_space<vmem>>, vector<512x256xbf16>
    %cst_10 = arith.constant dense<0.000000e+00> : vector<8x256xf32>
    %20 = tpu.matmul %18, %19, %cst_10 {dimension_numbers = #tpu.dot_dimension_numbers<[1], [0], [0], [1], [0, 0, 1, 1], [], []>} : vector<8x512xbf16>, vector<512x256xbf16>, vector<8x256xf32> -> vector<8x256xf32>
    %21 = vector.extract_strided_slice %0 {offsets = [2, 0], sizes = [1, 256], strides = [1, 1]} : vector<8x512xf32> to vector<1x256xf32>
    %22 = vector.broadcast %21 : vector<1x256xf32> to vector<8x256xf32>
    %23 = arith.addf %20, %22 : vector<8x256xf32>
    %cst_11 = arith.constant 0.000000e+00 : f32
    %24 = vector.broadcast %cst_11 : f32 to vector<8x256xf32>
    %25 = arith.maximumf %23, %24 : vector<8x256xf32>
    %26 = arith.truncf %25 : vector<8x256xf32> to vector<8x256xbf16>
    %c784 = arith.constant 784 : index
    %c0_12 = arith.constant 0 : index
    %27 = vector.load %arg2[%c784, %c0_12] : memref<1040x512xbf16, #tpu.memory_space<vmem>>, vector<256x128xbf16>
    %cst_13 = arith.constant dense<0.000000e+00> : vector<8x128xf32>
    %28 = tpu.matmul %26, %27, %cst_13 {dimension_numbers = #tpu.dot_dimension_numbers<[1], [0], [0], [1], [0, 0, 1, 1], [], []>} : vector<8x256xbf16>, vector<256x128xbf16>, vector<8x128xf32> -> vector<8x128xf32>
    %29 = vector.extract_strided_slice %0 {offsets = [3, 0], sizes = [1, 128], strides = [1, 1]} : vector<8x512xf32> to vector<1x128xf32>
    %30 = vector.broadcast %29 : vector<1x128xf32> to vector<8x128xf32>
    %31 = arith.addf %28, %30 : vector<8x128xf32>
    %c0_14 = arith.constant 0 : index
    %c0_15 = arith.constant 0 : index
    %32 = vector.load %arg4[%c0_14, %c0_15] : memref<8x128xf32, #tpu.memory_space<vmem>>, vector<8x128xf32>
    tpu.vector_store %arg4[%c0_14, %c0_15], %31 {strides = array<i32>} : memref<8x128xf32, #tpu.memory_space<vmem>>, vector<8x128xf32>,
    return
  }
  func.func @transform_0(%arg0: i32) -> (i32, i32) {
    %c0_i32 = arith.constant 0 : i32
    %c0_i32_0 = arith.constant 0 : i32
    return %arg0, %c0_i32 : i32, i32
  }
  func.func @transform_1(%arg0: i32) -> (i32, i32) {
    %c0_i32 = arith.constant 0 : i32
    %c0_i32_0 = arith.constant 0 : i32
    %c0_i32_1 = arith.constant 0 : i32
    return %c0_i32, %c0_i32_0 : i32, i32
  }
  func.func @transform_2(%arg0: i32) -> (i32, i32) {
    %c0_i32 = arith.constant 0 : i32
    %c0_i32_0 = arith.constant 0 : i32
    %c0_i32_1 = arith.constant 0 : i32
    return %c0_i32, %c0_i32_0 : i32, i32
  }
  func.func @transform_3(%arg0: i32) -> (i32, i32) {
    %c0_i32 = arith.constant 0 : i32
    %c0_i32_0 = arith.constant 0 : i32
    return %arg0, %c0_i32 : i32, i32
  }
}

</mosaic_0001>

<llo_original>
// kernel: _lambda_.1
$region0: #{_lambda_.1}
  #allocation0 [shape = 'u32[]', space=smem, size = 0x4, offset = 0x4, fixed_abs, tag = 'smem constant byte address 0x4 - core index']
  #allocation1 [shape = 'u32[72,128]{1,0:T(1,128)}', space=vmem, size = 0x9000, scoped, tag = 'internal scratch']
  %s0 = inlined_call_operand.vmem [shape: f32[8,16], index: 0, kind: input, shape index: {}]
  %s1 = inlined_call_operand.hbm [shape: bf16[1040,512], index: 1, kind: input, shape index: {}]
  %s2 = inlined_call_operand.vmem [shape: f32[8,512], index: 2, kind: input, shape index: {}]
  %s3 = inlined_call_operand.vmem [shape: f32[8,128], index: 3, kind: output, shape index: {}]
  %s4 = sld [smem:[#allocation0]]
  $region26: #{_lambda_.1} parent=0
    _
  %s6 = ssub.s32 1, %s4
  %s7 = scalar_select 0, %s6, %s4
  $region1: #{_lambda_.1} parent=0
    #allocation2 [shape = 'u8[1064960]{0}', space=vmem, size = 0x104000, scoped, tag = 'input window, operand 1, single buffered']
    #allocation3 [shape = 's32[1]{0}', space=sflag, size = 0x4, scoped, tag = 'scoped memory for _lambda_.1']
    %8 = vsyncpa [#allocation3], 0
    // Predicated region
    $region2: #{_lambda_.1} parent=1 // pred_check
      _
    $region3: #{_lambda_.1} parent=1 // pred_check_branch
      %10 = sbr.rel (0) target = $region5
    $region4: #{_lambda_.1} parent=1 // pred_region
      _
    $region5: #{_lambda_.1} parent=1 // pred_fallthru
      _
    // Predicated region
    $region6: #{_lambda_.1} parent=1 // pred_check
      _
    $region7: #{_lambda_.1} parent=1 // pred_check_branch
      %12 = sbr.rel (0) target = $region9
    $region8: #{_lambda_.1} parent=1 // pred_region
      %14 = vsyncadd [#allocation3], 0
      %s15 = sshll.u32 %s1, 4
      %s16 = int_to_ptr.hbm [resolvable:$true] %s15
      %s17 = sshll.u32 [#allocation2], 4
      %s18 = int_to_ptr.vmem [resolvable:$true] %s17
      %23 = dma.hbm_to_vmem [thread:$0]  %s16, 33280, %s18, [#allocation3], 256, 256, 16
    $region9: #{_lambda_.1} parent=1 // pred_fallthru
      _
    // Predicated region
    $region10: #{_lambda_.1} parent=1 // pred_check
      _
    $region11: #{_lambda_.1} parent=1 // pred_check_branch
      %25 = sbr.rel (0) target = $region13
    $region12: #{_lambda_.1} parent=1 // pred_region
      _
    $region13: #{_lambda_.1} parent=1 // pred_fallthru
      _
    // Predicated region
    $region14: #{_lambda_.1} parent=1 // pred_check
      _
    $region15: #{_lambda_.1} parent=1 // pred_check_branch
      %27 = sbr.rel (0) target = $region17
    $region16: #{_lambda_.1} parent=1 // pred_region
      %29 = dma.done [#allocation3], 33280
    $region17: #{_lambda_.1} parent=1 // pred_fallthru
      _
    %v31 = vld [vmem:[%s2] sm:$0xff]
    %v32 = vld [vmem:[%s2 + $0x8] sm:$0xff]
    %v33 = vld [vmem:[%s2 + $0x10] sm:$0xff]
    %v34 = vld [vmem:[%s2 + $0x18] sm:$0xff]
    %v35 = vld [vmem:[%s0] sm:$0xff]
    %v36 = vpack.c.bf16 %v35, %v35
    %v37 = vld [vmem:[#allocation2] sm:$0xff]
    %v38 = vld [vmem:[#allocation2 + $0x10] sm:$0xff]
    %v39 = vperm.slane %v31, 0
    %v40 = vperm.slane %v32, 0
    %v43 = vunpack.c.l.b16 %v37
    %v44 = vunpack.c.h.b16 %v37
    %v45 = vunpack.c.l.b16 %v38
    %v46 = vunpack.c.h.b16 %v38
    %v47 = vpack.c.b16 %v45, %v43
    %v48 = vpack.c.b16 %v46, %v44
    %vm51 = vcmask 130048
    %v53 = vsel %vm51, %v36, 0
    %55 = vmatpush.bf16.msra.mxu0 0
    %56 = vmatpush.bf16.msra.mxu0 0
    %57 = vmatpush.bf16.msra.mxu0 0
    %58 = vmatpush.bf16.msra.mxu0 0
    %59 = vmatpush.bf16.msra.mxu0 0
    %60 = vmatpush.bf16.msra.mxu0 0
    %61 = vmatpush.bf16.msra.mxu0 0
    %62 = vmatpush.bf16.msra.mxu0 %v47
    %63 = vmatmul.bf16.gmra.mxu0 %v53
    %v64 = vpop.f32.mrf.mxu0
    %v65 = vadd.f32 %v39, %v64
    %v66 = vpop.f32.mrf.mxu0
    %67 = vdwg.mxu0
    %68 = vmatpush.bf16.msra.mxu0 0
    %69 = vmatpush.bf16.msra.mxu0 0
    %70 = vmatpush.bf16.msra.mxu0 0
    %71 = vmatpush.bf16.msra.mxu0 0
    %72 = vmatpush.bf16.msra.mxu0 0
    %73 = vmatpush.bf16.msra.mxu0 0
    %74 = vmatpush.bf16.msra.mxu0 0
    %75 = vmatpush.bf16.msra.mxu0 %v48
    %76 = vmatmul.bf16.gmra.mxu0 %v53
    %v77 = vpop.f32.mrf.mxu0
    %v78 = vadd.f32 %v40, %v77
    %v79 = vpop.f32.mrf.mxu0
    %80 = vdwg.mxu0
    %v81 = vmax.f32 %v65, 0.0
    %v82 = vmax.f32 %v78, 0.0
    %v83 = vpack.c.bf16 %v81, %v81
    %v84 = vpack.c.bf16 %v82, %v82
    %v85 = vld [vmem:[#allocation2 + $0x20] sm:$0xff]
    %v86 = vld [vmem:[#allocation2 + $0x28] sm:$0xff]
    %v87 = vld [vmem:[#allocation2 + $0x30] sm:$0xff]
    %v88 = vld [vmem:[#allocation2 + $0x38] sm:$0xff]
    %v89 = vld [vmem:[#allocation2 + $0x40] sm:$0xff]
    %v90 = vld [vmem:[#allocation2 + $0x48] sm:$0xff]
    %v91 = vld [vmem:[#allocation2 + $0x50] sm:$0xff]
    %v92 = vld [vmem:[#allocation2 + $0x58] sm:$0xff]
    %v93 = vld [vmem:[#allocation2 + $0x60] sm:$0xff]
    %v94 = vld [vmem:[#allocation2 + $0x68] sm:$0xff]
    %v95 = vld [vmem:[#allocation2 + $0x70] sm:$0xff]
    %v96 = vld [vmem:[#allocation2 + $0x78] sm:$0xff]
    %v97 = vld [vmem:[#allocation2 + $0x80] sm:$0xff]
    %v98 = vld [vmem:[#allocation2 + $0x88] sm:$0xff]
    %v99 = vld [vmem:[#allocation2 + $0x90] sm:$0xff]
    %v100 = vld [vmem:[#allocation2 + $0x98] sm:$0xff]
    %v101 = vld [vmem:[#allocation2 + $0xa0] sm:$0xff]
    %v102 = vld [vmem:[#allocation2 + $0xa8] sm:$0xff]
    %v103 = vld [vmem:[#allocation2 + $0xb0] sm:$0xff]
    %v104 = vld [vmem:[#allocation2 + $0xb8] sm:$0xff]
    %v105 = vld [vmem:[#allocation2 + $0xc0] sm:$0xff]
    %v106 = vld [vmem:[#allocation2 + $0xc8] sm:$0xff]
    %v107 = vld [vmem:[#allocation2 + $0xd0] sm:$0xff]
    %v108 = vld [vmem:[#allocation2 + $0xd8] sm:$0xff]
    %v109 = vld [vmem:[#allocation2 + $0xe0] sm:$0xff]
    %v110 = vld [vmem:[#allocation2 + $0xe8] sm:$0xff]
    %v111 = vld [vmem:[#allocation2 + $0xf0] sm:$0xff]
    %v112 = vld [vmem:[#allocation2 + $0xf8] sm:$0xff]
    %v113 = vld [vmem:[#allocation2 + $0x100] sm:$0xff]
    %v114 = vld [vmem:[#allocation2 + $0x108] sm:$0xff]
    %v115 = vld [vmem:[#allocation2 + $0x110] sm:$0xff]
    %v116 = vld [vmem:[#allocation2 + $0x118] sm:$0xff]
    %v117 = vld [vmem:[#allocation2 + $0x120] sm:$0xff]
    %v118 = vld [vmem:[#allocation2 + $0x128] sm:$0xff]
    %v119 = vld [vmem:[#allocation2 + $0x130] sm:$0xff]
    %v120 = vld [vmem:[#allocation2 + $0x138] sm:$0xff]
    %v121 = vld [vmem:[#allocation2 + $0x140] sm:$0xff]
    %v122 = vld [vmem:[#allocation2 + $0x148] sm:$0xff]
    %v123 = vld [vmem:[#allocation2 + $0x150] sm:$0xff]
    %v124 = vld [vmem:[#allocation2 + $0x158] sm:$0xff]
    %v125 = vld [vmem:[#allocation2 + $0x160] sm:$0xff]
    %v126 = vld [vmem:[#allocation2 + $0x168] sm:$0xff]
    %v127 = vld [vmem:[#allocation2 + $0x170] sm:$0xff]
    %v128 = vld [vmem:[#allocation2 + $0x178] sm:$0xff]
    %v129 = vld [vmem:[#allocation2 + $0x180] sm:$0xff]
    %v130 = vld [vmem:[#allocation2 + $0x188] sm:$0xff]
    %v131 = vld [vmem:[#allocation2 + $0x190] sm:$0xff]
    %v132 = vld [vmem:[#allocation2 + $0x198] sm:$0xff]
    %v133 = vld [vmem:[#allocation2 + $0x1a0] sm:$0xff]
    %v134 = vld [vmem:[#allocation2 + $0x1a8] sm:$0xff]
    %v135 = vld [vmem:[#allocation2 + $0x1b0] sm:$0xff]
    %v136 = vld [vmem:[#allocation2 + $0x1b8] sm:$0xff]
    %v137 = vld [vmem:[#allocation2 + $0x1c0] sm:$0xff]
    %v138 = vld [vmem:[#allocation2 + $0x1c8] sm:$0xff]
    %v139 = vld [vmem:[#allocation2 + $0x1d0] sm:$0xff]
    %v140 = vld [vmem:[#allocation2 + $0x1d8] sm:$0xff]
    %v141 = vld [vmem:[#allocation2 + $0x1e0] sm:$0xff]
    %v142 = vld [vmem:[#allocation2 + $0x1e8] sm:$0xff]
    %v143 = vld [vmem:[#allocation2 + $0x1f0] sm:$0xff]
    %v144 = vld [vmem:[#allocation2 + $0x1f8] sm:$0xff]
    %v145 = vld [vmem:[#allocation2 + $0x200] sm:$0xff]
    %v146 = vld [vmem:[#allocation2 + $0x208] sm:$0xff]
    %v147 = vld [vmem:[#allocation2 + $0x210] sm:$0xff]
    %v148 = vld [vmem:[#allocation2 + $0x218] sm:$0xff]
    %v149 = vperm.slane %v31, 1
    %v150 = vperm.slane %v32, 1
    %v151 = vperm.slane %v33, 1
    %v152 = vperm.slane %v34, 1
    %v217 = vunpack.c.l.b16 %v85
    %v218 = vunpack.c.h.b16 %v85
    %v219 = vunpack.c.l.b16 %v86
    %v220 = vunpack.c.h.b16 %v86
    %v221 = vunpack.c.l.b16 %v87
    %v222 = vunpack.c.h.b16 %v87
    %v223 = vunpack.c.l.b16 %v88
    %v224 = vunpack.c.h.b16 %v88
    %v225 = vunpack.c.l.b16 %v89
    %v226 = vunpack.c.h.b16 %v89
    %v227 = vunpack.c.l.b16 %v90
    %v228 = vunpack.c.h.b16 %v90
    %v229 = vunpack.c.l.b16 %v91
    %v230 = vunpack.c.h.b16 %v91
    %v231 = vunpack.c.l.b16 %v92
    %v232 = vunpack.c.h.b16 %v92
    %v233 = vunpack.c.l.b16 %v93
    %v234 = vunpack.c.h.b16 %v93
    %v235 = vunpack.c.l.b16 %v94
    %v236 = vunpack.c.h.b16 %v94
    %v237 = vunpack.c.l.b16 %v95
    %v238 = vunpack.c.h.b16 %v95
    %v239 = vunpack.c.l.b16 %v96
    %v240 = vunpack.c.h.b16 %v96
    %v241 = vunpack.c.l.b16 %v97
    %v242 = vunpack.c.h.b16 %v97
    %v243 = vunpack.c.l.b16 %v98
    %v244 = vunpack.c.h.b16 %v98
    %v245 = vunpack.c.l.b16 %v99
    %v246 = vunpack.c.h.b16 %v99
    %v247 = vunpack.c.l.b16 %v100
    %v248 = vunpack.c.h.b16 %v100
    %v249 = vunpack.c.l.b16 %v101
    %v250 = vunpack.c.h.b16 %v101
    %v251 = vunpack.c.l.b16 %v102
    %v252 = vunpack.c.h.b16 %v102
    %v253 = vunpack.c.l.b16 %v103
    %v254 = vunpack.c.h.b16 %v103
    %v255 = vunpack.c.l.b16 %v104
    %v256 = vunpack.c.h.b16 %v104
    %v257 = vunpack.c.l.b16 %v105
    %v258 = vunpack.c.h.b16 %v105
    %v259 = vunpack.c.l.b16 %v106
    %v260 = vunpack.c.h.b16 %v106
    %v261 = vunpack.c.l.b16 %v107
    %v262 = vunpack.c.h.b16 %v107
    %v263 = vunpack.c.l.b16 %v108
    %v264 = vunpack.c.h.b16 %v108
    %v265 = vunpack.c.l.b16 %v109
    %v266 = vunpack.c.h.b16 %v109
    %v267 = vunpack.c.l.b16 %v110
    %v268 = vunpack.c.h.b16 %v110
    %v269 = vunpack.c.l.b16 %v111
    %v270 = vunpack.c.h.b16 %v111
    %v271 = vunpack.c.l.b16 %v112
    %v272 = vunpack.c.h.b16 %v112
    %v273 = vunpack.c.l.b16 %v113
    %v274 = vunpack.c.h.b16 %v113
    %v275 = vunpack.c.l.b16 %v114
    %v276 = vunpack.c.h.b16 %v114
    %v277 = vunpack.c.l.b16 %v115
    %v278 = vunpack.c.h.b16 %v115
    %v279 = vunpack.c.l.b16 %v116
    %v280 = vunpack.c.h.b16 %v116
    %v281 = vunpack.c.l.b16 %v117
    %v282 = vunpack.c.h.b16 %v117
    %v283 = vunpack.c.l.b16 %v118
    %v284 = vunpack.c.h.b16 %v118
    %v285 = vunpack.c.l.b16 %v119
    %v286 = vunpack.c.h.b16 %v119
    %v287 = vunpack.c.l.b16 %v120
    %v288 = vunpack.c.h.b16 %v120
    %v289 = vunpack.c.l.b16 %v121
    %v290 = vunpack.c.h.b16 %v121
    %v291 = vunpack.c.l.b16 %v122
    %v292 = vunpack.c.h.b16 %v122
    %v293 = vunpack.c.l.b16 %v123
    %v294 = vunpack.c.h.b16 %v123
    %v295 = vunpack.c.l.b16 %v124
    %v296 = vunpack.c.h.b16 %v124
    %v297 = vunpack.c.l.b16 %v125
    %v298 = vunpack.c.h.b16 %v125
    %v299 = vunpack.c.l.b16 %v126
    %v300 = vunpack.c.h.b16 %v126
    %v301 = vunpack.c.l.b16 %v127
    %v302 = vunpack.c.h.b16 %v127
    %v303 = vunpack.c.l.b16 %v128
    %v304 = vunpack.c.h.b16 %v128
    %v305 = vunpack.c.l.b16 %v129
    %v306 = vunpack.c.h.b16 %v129
    %v307 = vunpack.c.l.b16 %v130
    %v308 = vunpack.c.h.b16 %v130
    %v309 = vunpack.c.l.b16 %v131
    %v310 = vunpack.c.h.b16 %v131
    %v311 = vunpack.c.l.b16 %v132
    %v312 = vunpack.c.h.b16 %v132
    %v313 = vunpack.c.l.b16 %v133
    %v314 = vunpack.c.h.b16 %v133
    %v315 = vunpack.c.l.b16 %v134
    %v316 = vunpack.c.h.b16 %v134
    %v317 = vunpack.c.l.b16 %v135
    %v318 = vunpack.c.h.b16 %v135
    %v319 = vunpack.c.l.b16 %v136
    %v320 = vunpack.c.h.b16 %v136
    %v321 = vunpack.c.l.b16 %v137
    %v322 = vunpack.c.h.b16 %v137
    %v323 = vunpack.c.l.b16 %v138
    %v324 = vunpack.c.h.b16 %v138
    %v325 = vunpack.c.l.b16 %v139
    %v326 = vunpack.c.h.b16 %v139
    %v327 = vunpack.c.l.b16 %v140
    %v328 = vunpack.c.h.b16 %v140
    %v329 = vunpack.c.l.b16 %v141
    %v330 = vunpack.c.h.b16 %v141
    %v331 = vunpack.c.l.b16 %v142
    %v332 = vunpack.c.h.b16 %v142
    %v333 = vunpack.c.l.b16 %v143
    %v334 = vunpack.c.h.b16 %v143
    %v335 = vunpack.c.l.b16 %v144
    %v336 = vunpack.c.h.b16 %v144
    %v337 = vunpack.c.l.b16 %v145
    %v338 = vunpack.c.h.b16 %v145
    %v339 = vunpack.c.l.b16 %v146
    %v340 = vunpack.c.h.b16 %v146
    %v341 = vunpack.c.l.b16 %v147
    %v342 = vunpack.c.h.b16 %v147
    %v343 = vunpack.c.l.b16 %v148
    %v344 = vunpack.c.h.b16 %v148
    %v345 = vpack.c.b16 %v221, %v217
    %v346 = vpack.c.b16 %v222, %v218
    %v347 = vpack.c.b16 %v223, %v219
    %v348 = vpack.c.b16 %v224, %v220
    %v349 = vpack.c.b16 %v229, %v225
    %v350 = vpack.c.b16 %v230, %v226
    %v351 = vpack.c.b16 %v231, %v227
    %v352 = vpack.c.b16 %v232, %v228
    %v353 = vpack.c.b16 %v237, %v233
    %v354 = vpack.c.b16 %v238, %v234
    %v355 = vpack.c.b16 %v239, %v235
    %v356 = vpack.c.b16 %v240, %v236
    %v357 = vpack.c.b16 %v245, %v241
    %v358 = vpack.c.b16 %v246, %v242
    %v359 = vpack.c.b16 %v247, %v243
    %v360 = vpack.c.b16 %v248, %v244
    %v361 = vpack.c.b16 %v253, %v249
    %v362 = vpack.c.b16 %v254, %v250
    %v363 = vpack.c.b16 %v255, %v251
    %v364 = vpack.c.b16 %v256, %v252
    %v365 = vpack.c.b16 %v261, %v257
    %v366 = vpack.c.b16 %v262, %v258
    %v367 = vpack.c.b16 %v263, %v259
    %v368 = vpack.c.b16 %v264, %v260
    %v369 = vpack.c.b16 %v269, %v265
    %v370 = vpack.c.b16 %v270, %v266
    %v371 = vpack.c.b16 %v271, %v267
    %v372 = vpack.c.b16 %v272, %v268
    %v373 = vpack.c.b16 %v277, %v273
    %v374 = vpack.c.b16 %v278, %v274
    %v375 = vpack.c.b16 %v279, %v275
    %v376 = vpack.c.b16 %v280, %v276
    %v377 = vpack.c.b16 %v285, %v281
    %v378 = vpack.c.b16 %v286, %v282
    %v379 = vpack.c.b16 %v287, %v283
    %v380 = vpack.c.b16 %v288, %v284
    %v381 = vpack.c.b16 %v293, %v289
    %v382 = vpack.c.b16 %v294, %v290
    %v383 = vpack.c.b16 %v295, %v291
    %v384 = vpack.c.b16 %v296, %v292
    %v385 = vpack.c.b16 %v301, %v297
    %v386 = vpack.c.b16 %v302, %v298
    %v387 = vpack.c.b16 %v303, %v299
    %v388 = vpack.c.b16 %v304, %v300
    %v389 = vpack.c.b16 %v309, %v305
    %v390 = vpack.c.b16 %v310, %v306
    %v391 = vpack.c.b16 %v311, %v307
    %v392 = vpack.c.b16 %v312, %v308
    %v393 = vpack.c.b16 %v317, %v313
    %v394 = vpack.c.b16 %v318, %v314
    %v395 = vpack.c.b16 %v319, %v315
    %v396 = vpack.c.b16 %v320, %v316
    %v397 = vpack.c.b16 %v325, %v321
    %v398 = vpack.c.b16 %v326, %v322
    %v399 = vpack.c.b16 %v327, %v323
    %v400 = vpack.c.b16 %v328, %v324
    %v401 = vpack.c.b16 %v333, %v329
    %v402 = vpack.c.b16 %v334, %v330
    %v403 = vpack.c.b16 %v335, %v331
    %v404 = vpack.c.b16 %v336, %v332
    %v405 = vpack.c.b16 %v341, %v337
    %v406 = vpack.c.b16 %v342, %v338
    %v407 = vpack.c.b16 %v343, %v339
    %v408 = vpack.c.b16 %v344, %v340
    %473 = vmatpush.bf16.msra.mxu0 %v373
    %474 = vmatpush.bf16.msra.mxu0 %v369
    %475 = vmatpush.bf16.msra.mxu0 %v365
    %476 = vmatpush.bf16.msra.mxu0 %v361
    %477 = vmatpush.bf16.msra.mxu0 %v357
    %478 = vmatpush.bf16.msra.mxu0 %v353
    %479 = vmatpush.bf16.msra.mxu0 %v349
    %480 = vmatpush.bf16.msra.mxu0 %v345
    %481 = vmatmul.bf16.gmra.mxu0 %v83
    %v482 = vpop.f32.mrf.mxu0
    %v483 = vadd.f32 %v149, %v482
    %v484 = vpop.f32.mrf.mxu0
    %485 = vdwg.mxu0
    %486 = vmatpush.bf16.msra.mxu0 %v405
    %487 = vmatpush.bf16.msra.mxu0 %v401
    %488 = vmatpush.bf16.msra.mxu0 %v397
    %489 = vmatpush.bf16.msra.mxu0 %v393
    %490 = vmatpush.bf16.msra.mxu0 %v389
    %491 = vmatpush.bf16.msra.mxu0 %v385
    %492 = vmatpush.bf16.msra.mxu0 %v381
    %493 = vmatpush.bf16.msra.mxu0 %v377
    %494 = vmatmul.bf16.gmra.mxu0 %v84
    %v495 = vpop.f32.mrf.mxu0
    %v496 = vadd.f32 %v483, %v495
    %v497 = vpop.f32.mrf.mxu0
    %498 = vdwg.mxu0
    %499 = vmatpush.bf16.msra.mxu0 %v374
    %500 = vmatpush.bf16.msra.mxu0 %v370
    %501 = vmatpush.bf16.msra.mxu0 %v366
    %502 = vmatpush.bf16.msra.mxu0 %v362
    %503 = vmatpush.bf16.msra.mxu0 %v358
    %504 = vmatpush.bf16.msra.mxu0 %v354
    %505 = vmatpush.bf16.msra.mxu0 %v350
    %506 = vmatpush.bf16.msra.mxu0 %v346
    %507 = vmatmul.bf16.gmra.mxu0 %v83
    %v508 = vpop.f32.mrf.mxu0
    %v509 = vadd.f32 %v150, %v508
    %v510 = vpop.f32.mrf.mxu0
    %511 = vdwg.mxu0
    %512 = vmatpush.bf16.msra.mxu0 %v406
    %513 = vmatpush.bf16.msra.mxu0 %v402
    %514 = vmatpush.bf16.msra.mxu0 %v398
    %515 = vmatpush.bf16.msra.mxu0 %v394
    %516 = vmatpush.bf16.msra.mxu0 %v390
    %517 = vmatpush.bf16.msra.mxu0 %v386
    %518 = vmatpush.bf16.msra.mxu0 %v382
    %519 = vmatpush.bf16.msra.mxu0 %v378
    %520 = vmatmul.bf16.gmra.mxu0 %v84
    %v521 = vpop.f32.mrf.mxu0
    %v522 = vadd.f32 %v509, %v521
    %v523 = vpop.f32.mrf.mxu0
    %524 = vdwg.mxu0
    %525 = vmatpush.bf16.msra.mxu0 %v375
    %526 = vmatpush.bf16.msra.mxu0 %v371
    %527 = vmatpush.bf16.msra.mxu0 %v367
    %528 = vmatpush.bf16.msra.mxu0 %v363
    %529 = vmatpush.bf16.msra.mxu0 %v359
    %530 = vmatpush.bf16.msra.mxu0 %v355
    %531 = vmatpush.bf16.msra.mxu0 %v351
    %532 = vmatpush.bf16.msra.mxu0 %v347
    %533 = vmatmul.bf16.gmra.mxu0 %v83
    %v534 = vpop.f32.mrf.mxu0
    %v535 = vadd.f32 %v151, %v534
    %v536 = vpop.f32.mrf.mxu0
    %537 = vdwg.mxu0
    %538 = vmatpush.bf16.msra.mxu0 %v407
    %539 = vmatpush.bf16.msra.mxu0 %v403
    %540 = vmatpush.bf16.msra.mxu0 %v399
    %541 = vmatpush.bf16.msra.mxu0 %v395
    %542 = vmatpush.bf16.msra.mxu0 %v391
    %543 = vmatpush.bf16.msra.mxu0 %v387
    %544 = vmatpush.bf16.msra.mxu0 %v383
    %545 = vmatpush.bf16.msra.mxu0 %v379
    %546 = vmatmul.bf16.gmra.mxu0 %v84
    %v547 = vpop.f32.mrf.mxu0
    %v548 = vadd.f32 %v535, %v547
    %v549 = vpop.f32.mrf.mxu0
    %550 = vdwg.mxu0
    %551 = vmatpush.bf16.msra.mxu0 %v376
    %552 = vmatpush.bf16.msra.mxu0 %v372
    %553 = vmatpush.bf16.msra.mxu0 %v368
    %554 = vmatpush.bf16.msra.mxu0 %v364
    %555 = vmatpush.bf16.msra.mxu0 %v360
    %556 = vmatpush.bf16.msra.mxu0 %v356
    %557 = vmatpush.bf16.msra.mxu0 %v352
    %558 = vmatpush.bf16.msra.mxu0 %v348
    %559 = vmatmul.bf16.gmra.mxu0 %v83
    %v560 = vpop.f32.mrf.mxu0
    %v561 = vadd.f32 %v152, %v560
    %v562 = vpop.f32.mrf.mxu0
    %563 = vdwg.mxu0
    %564 = vmatpush.bf16.msra.mxu0 %v408
    %565 = vmatpush.bf16.msra.mxu0 %v404
    %566 = vmatpush.bf16.msra.mxu0 %v400
    %567 = vmatpush.bf16.msra.mxu0 %v396
    %568 = vmatpush.bf16.msra.mxu0 %v392
    %569 = vmatpush.bf16.msra.mxu0 %v388
    %570 = vmatpush.bf16.msra.mxu0 %v384
    %571 = vmatpush.bf16.msra.mxu0 %v380
    %572 = vmatmul.bf16.gmra.mxu0 %v84
    %v573 = vpop.f32.mrf.mxu0
    %v574 = vadd.f32 %v561, %v573
    %v575 = vpop.f32.mrf.mxu0
    %576 = vdwg.mxu0
    %v577 = vmax.f32 %v496, 0.0
    %v578 = vmax.f32 %v522, 0.0
    %v579 = vmax.f32 %v548, 0.0
    %v580 = vmax.f32 %v574, 0.0
    %v581 = vpack.c.bf16 %v577, %v577
    %v582 = vpack.c.bf16 %v578, %v578
    %v583 = vpack.c.bf16 %v579, %v579
    %v584 = vpack.c.bf16 %v580, %v580
    %v585 = vld [vmem:[#allocation2 + $0x220] sm:$0xff]
    %v586 = vld [vmem:[#allocation2 + $0x230] sm:$0xff]
    %v587 = vld [vmem:[#allocation2 + $0x240] sm:$0xff]
    %v588 = vld [vmem:[#allocation2 + $0x250] sm:$0xff]
    %v589 = vld [vmem:[#allocation2 + $0x260] sm:$0xff]
    %v590 = vld [vmem:[#allocation2 + $0x270] sm:$0xff]
    %v591 = vld [vmem:[#allocation2 + $0x280] sm:$0xff]
    %v592 = vld [vmem:[#allocation2 + $0x290] sm:$0xff]
    %v593 = vld [vmem:[#allocation2 + $0x2a0] sm:$0xff]
    %v594 = vld [vmem:[#allocation2 + $0x2b0] sm:$0xff]
    %v595 = vld [vmem:[#allocation2 + $0x2c0] sm:$0xff]
    %v596 = vld [vmem:[#allocation2 + $0x2d0] sm:$0xff]
    %v597 = vld [vmem:[#allocation2 + $0x2e0] sm:$0xff]
    %v598 = vld [vmem:[#allocation2 + $0x2f0] sm:$0xff]
    %v599 = vld [vmem:[#allocation2 + $0x300] sm:$0xff]
    %v600 = vld [vmem:[#allocation2 + $0x310] sm:$0xff]
    %v601 = vld [vmem:[#allocation2 + $0x320] sm:$0xff]
    %v602 = vld [vmem:[#allocation2 + $0x330] sm:$0xff]
    %v603 = vld [vmem:[#allocation2 + $0x340] sm:$0xff]
    %v604 = vld [vmem:[#allocation2 + $0x350] sm:$0xff]
    %v605 = vld [vmem:[#allocation2 + $0x360] sm:$0xff]
    %v606 = vld [vmem:[#allocation2 + $0x370] sm:$0xff]
    %v607 = vld [vmem:[#allocation2 + $0x380] sm:$0xff]
    %v608 = vld [vmem:[#allocation2 + $0x390] sm:$0xff]
    %v609 = vld [vmem:[#allocation2 + $0x3a0] sm:$0xff]
    %v610 = vld [vmem:[#allocation2 + $0x3b0] sm:$0xff]
    %v611 = vld [vmem:[#allocation2 + $0x3c0] sm:$0xff]
    %v612 = vld [vmem:[#allocation2 + $0x3d0] sm:$0xff]
    %v613 = vld [vmem:[#allocation2 + $0x3e0] sm:$0xff]
    %v614 = vld [vmem:[#allocation2 + $0x3f0] sm:$0xff]
    %v615 = vld [vmem:[#allocation2 + $0x400] sm:$0xff]
    %v616 = vld [vmem:[#allocation2 + $0x410] sm:$0xff]
    %v617 = vld [vmem:[#allocation2 + $0x420] sm:$0xff]
    %v618 = vld [vmem:[#allocation2 + $0x430] sm:$0xff]
    %v619 = vld [vmem:[#allocation2 + $0x440] sm:$0xff]
    %v620 = vld [vmem:[#allocation2 + $0x450] sm:$0xff]
    %v621 = vld [vmem:[#allocation2 + $0x460] sm:$0xff]
    %v622 = vld [vmem:[#allocation2 + $0x470] sm:$0xff]
    %v623 = vld [vmem:[#allocation2 + $0x480] sm:$0xff]
    %v624 = vld [vmem:[#allocation2 + $0x490] sm:$0xff]
    %v625 = vld [vmem:[#allocation2 + $0x4a0] sm:$0xff]
    %v626 = vld [vmem:[#allocation2 + $0x4b0] sm:$0xff]
    %v627 = vld [vmem:[#allocation2 + $0x4c0] sm:$0xff]
    %v628 = vld [vmem:[#allocation2 + $0x4d0] sm:$0xff]
    %v629 = vld [vmem:[#allocation2 + $0x4e0] sm:$0xff]
    %v630 = vld [vmem:[#allocation2 + $0x4f0] sm:$0xff]
    %v631 = vld [vmem:[#allocation2 + $0x500] sm:$0xff]
    %v632 = vld [vmem:[#allocation2 + $0x510] sm:$0xff]
    %v633 = vld [vmem:[#allocation2 + $0x520] sm:$0xff]
    %v634 = vld [vmem:[#allocation2 + $0x530] sm:$0xff]
    %v635 = vld [vmem:[#allocation2 + $0x540] sm:$0xff]
    %v636 = vld [vmem:[#allocation2 + $0x550] sm:$0xff]
    %v637 = vld [vmem:[#allocation2 + $0x560] sm:$0xff]
    %v638 = vld [vmem:[#allocation2 + $0x570] sm:$0xff]
    %v639 = vld [vmem:[#allocation2 + $0x580] sm:$0xff]
    %v640 = vld [vmem:[#allocation2 + $0x590] sm:$0xff]
    %v641 = vld [vmem:[#allocation2 + $0x5a0] sm:$0xff]
    %v642 = vld [vmem:[#allocation2 + $0x5b0] sm:$0xff]
    %v643 = vld [vmem:[#allocation2 + $0x5c0] sm:$0xff]
    %v644 = vld [vmem:[#allocation2 + $0x5d0] sm:$0xff]
    %v645 = vld [vmem:[#allocation2 + $0x5e0] sm:$0xff]
    %v646 = vld [vmem:[#allocation2 + $0x5f0] sm:$0xff]
    %v647 = vld [vmem:[#allocation2 + $0x600] sm:$0xff]
    %v648 = vld [vmem:[#allocation2 + $0x610] sm:$0xff]
    %v649 = vperm.slane %v31, 2
    %v650 = vperm.slane %v32, 2
    %v715 = vunpack.c.l.b16 %v585
    %v716 = vunpack.c.h.b16 %v585
    %v717 = vunpack.c.l.b16 %v586
    %v718 = vunpack.c.h.b16 %v586
    %v719 = vunpack.c.l.b16 %v587
    %v720 = vunpack.c.h.b16 %v587
    %v721 = vunpack.c.l.b16 %v588
    %v722 = vunpack.c.h.b16 %v588
    %v723 = vunpack.c.l.b16 %v589
    %v724 = vunpack.c.h.b16 %v589
    %v725 = vunpack.c.l.b16 %v590
    %v726 = vunpack.c.h.b16 %v590
    %v727 = vunpack.c.l.b16 %v591
    %v728 = vunpack.c.h.b16 %v591
    %v729 = vunpack.c.l.b16 %v592
    %v730 = vunpack.c.h.b16 %v592
    %v731 = vunpack.c.l.b16 %v593
    %v732 = vunpack.c.h.b16 %v593
    %v733 = vunpack.c.l.b16 %v594
    %v734 = vunpack.c.h.b16 %v594
    %v735 = vunpack.c.l.b16 %v595
    %v736 = vunpack.c.h.b16 %v595
    %v737 = vunpack.c.l.b16 %v596
    %v738 = vunpack.c.h.b16 %v596
    %v739 = vunpack.c.l.b16 %v597
    %v740 = vunpack.c.h.b16 %v597
    %v741 = vunpack.c.l.b16 %v598
    %v742 = vunpack.c.h.b16 %v598
    %v743 = vunpack.c.l.b16 %v599
    %v744 = vunpack.c.h.b16 %v599
    %v745 = vunpack.c.l.b16 %v600
    %v746 = vunpack.c.h.b16 %v600
    %v747 = vunpack.c.l.b16 %v601
    %v748 = vunpack.c.h.b16 %v601
    %v749 = vunpack.c.l.b16 %v602
    %v750 = vunpack.c.h.b16 %v602
    %v751 = vunpack.c.l.b16 %v603
    %v752 = vunpack.c.h.b16 %v603
    %v753 = vunpack.c.l.b16 %v604
    %v754 = vunpack.c.h.b16 %v604
    %v755 = vunpack.c.l.b16 %v605
    %v756 = vunpack.c.h.b16 %v605
    %v757 = vunpack.c.l.b16 %v606
    %v758 = vunpack.c.h.b16 %v606
    %v759 = vunpack.c.l.b16 %v607
    %v760 = vunpack.c.h.b16 %v607
    %v761 = vunpack.c.l.b16 %v608
    %v762 = vunpack.c.h.b16 %v608
    %v763 = vunpack.c.l.b16 %v609
    %v764 = vunpack.c.h.b16 %v609
    %v765 = vunpack.c.l.b16 %v610
    %v766 = vunpack.c.h.b16 %v610
    %v767 = vunpack.c.l.b16 %v611
    %v768 = vunpack.c.h.b16 %v611
    %v769 = vunpack.c.l.b16 %v612
    %v770 = vunpack.c.h.b16 %v612
    %v771 = vunpack.c.l.b16 %v613
    %v772 = vunpack.c.h.b16 %v613
    %v773 = vunpack.c.l.b16 %v614
    %v774 = vunpack.c.h.b16 %v614
    %v775 = vunpack.c.l.b16 %v615
    %v776 = vunpack.c.h.b16 %v615
    %v777 = vunpack.c.l.b16 %v616
    %v778 = vunpack.c.h.b16 %v616
    %v779 = vunpack.c.l.b16 %v617
    %v780 = vunpack.c.h.b16 %v617
    %v781 = vunpack.c.l.b16 %v618
    %v782 = vunpack.c.h.b16 %v618
    %v783 = vunpack.c.l.b16 %v619
    %v784 = vunpack.c.h.b16 %v619
    %v785 = vunpack.c.l.b16 %v620
    %v786 = vunpack.c.h.b16 %v620
    %v787 = vunpack.c.l.b16 %v621
    %v788 = vunpack.c.h.b16 %v621
    %v789 = vunpack.c.l.b16 %v622
    %v790 = vunpack.c.h.b16 %v622
    %v791 = vunpack.c.l.b16 %v623
    %v792 = vunpack.c.h.b16 %v623
    %v793 = vunpack.c.l.b16 %v624
    %v794 = vunpack.c.h.b16 %v624
    %v795 = vunpack.c.l.b16 %v625
    %v796 = vunpack.c.h.b16 %v625
    %v797 = vunpack.c.l.b16 %v626
    %v798 = vunpack.c.h.b16 %v626
    %v799 = vunpack.c.l.b16 %v627
    %v800 = vunpack.c.h.b16 %v627
    %v801 = vunpack.c.l.b16 %v628
    %v802 = vunpack.c.h.b16 %v628
    %v803 = vunpack.c.l.b16 %v629
    %v804 = vunpack.c.h.b16 %v629
    %v805 = vunpack.c.l.b16 %v630
    %v806 = vunpack.c.h.b16 %v630
    %v807 = vunpack.c.l.b16 %v631
    %v808 = vunpack.c.h.b16 %v631
    %v809 = vunpack.c.l.b16 %v632
    %v810 = vunpack.c.h.b16 %v632
    %v811 = vunpack.c.l.b16 %v633
    %v812 = vunpack.c.h.b16 %v633
    %v813 = vunpack.c.l.b16 %v634
    %v814 = vunpack.c.h.b16 %v634
    %v815 = vunpack.c.l.b16 %v635
    %v816 = vunpack.c.h.b16 %v635
    %v817 = vunpack.c.l.b16 %v636
    %v818 = vunpack.c.h.b16 %v636
    %v819 = vunpack.c.l.b16 %v637
    %v820 = vunpack.c.h.b16 %v637
    %v821 = vunpack.c.l.b16 %v638
    %v822 = vunpack.c.h.b16 %v638
    %v823 = vunpack.c.l.b16 %v639
    %v824 = vunpack.c.h.b16 %v639
    %v825 = vunpack.c.l.b16 %v640
    %v826 = vunpack.c.h.b16 %v640
    %v827 = vunpack.c.l.b16 %v641
    %v828 = vunpack.c.h.b16 %v641
    %v829 = vunpack.c.l.b16 %v642
    %v830 = vunpack.c.h.b16 %v642
    %v831 = vunpack.c.l.b16 %v643
    %v832 = vunpack.c.h.b16 %v643
    %v833 = vunpack.c.l.b16 %v644
    %v834 = vunpack.c.h.b16 %v644
    %v835 = vunpack.c.l.b16 %v645
    %v836 = vunpack.c.h.b16 %v645
    %v837 = vunpack.c.l.b16 %v646
    %v838 = vunpack.c.h.b16 %v646
    %v839 = vunpack.c.l.b16 %v647
    %v840 = vunpack.c.h.b16 %v647
    %v841 = vunpack.c.l.b16 %v648
    %v842 = vunpack.c.h.b16 %v648
    %v843 = vpack.c.b16 %v717, %v715
    %v844 = vpack.c.b16 %v718, %v716
    %v845 = vpack.c.b16 %v721, %v719
    %v846 = vpack.c.b16 %v722, %v720
    %v847 = vpack.c.b16 %v725, %v723
    %v848 = vpack.c.b16 %v726, %v724
    %v849 = vpack.c.b16 %v729, %v727
    %v850 = vpack.c.b16 %v730, %v728
    %v851 = vpack.c.b16 %v733, %v731
    %v852 = vpack.c.b16 %v734, %v732
    %v853 = vpack.c.b16 %v737, %v735
    %v854 = vpack.c.b16 %v738, %v736
    %v855 = vpack.c.b16 %v741, %v739
    %v856 = vpack.c.b16 %v742, %v740
    %v857 = vpack.c.b16 %v745, %v743
    %v858 = vpack.c.b16 %v746, %v744
    %v859 = vpack.c.b16 %v749, %v747
    %v860 = vpack.c.b16 %v750, %v748
    %v861 = vpack.c.b16 %v753, %v751
    %v862 = vpack.c.b16 %v754, %v752
    %v863 = vpack.c.b16 %v757, %v755
    %v864 = vpack.c.b16 %v758, %v756
    %v865 = vpack.c.b16 %v761, %v759
    %v866 = vpack.c.b16 %v762, %v760
    %v867 = vpack.c.b16 %v765, %v763
    %v868 = vpack.c.b16 %v766, %v764
    %v869 = vpack.c.b16 %v769, %v767
    %v870 = vpack.c.b16 %v770, %v768
    %v871 = vpack.c.b16 %v773, %v771
    %v872 = vpack.c.b16 %v774, %v772
    %v873 = vpack.c.b16 %v777, %v775
    %v874 = vpack.c.b16 %v778, %v776
    %v875 = vpack.c.b16 %v781, %v779
    %v876 = vpack.c.b16 %v782, %v780
    %v877 = vpack.c.b16 %v785, %v783
    %v878 = vpack.c.b16 %v786, %v784
    %v879 = vpack.c.b16 %v789, %v787
    %v880 = vpack.c.b16 %v790, %v788
    %v881 = vpack.c.b16 %v793, %v791
    %v882 = vpack.c.b16 %v794, %v792
    %v883 = vpack.c.b16 %v797, %v795
    %v884 = vpack.c.b16 %v798, %v796
    %v885 = vpack.c.b16 %v801, %v799
    %v886 = vpack.c.b16 %v802, %v800
    %v887 = vpack.c.b16 %v805, %v803
    %v888 = vpack.c.b16 %v806, %v804
    %v889 = vpack.c.b16 %v809, %v807
    %v890 = vpack.c.b16 %v810, %v808
    %v891 = vpack.c.b16 %v813, %v811
    %v892 = vpack.c.b16 %v814, %v812
    %v893 = vpack.c.b16 %v817, %v815
    %v894 = vpack.c.b16 %v818, %v816
    %v895 = vpack.c.b16 %v821, %v819
    %v896 = vpack.c.b16 %v822, %v820
    %v897 = vpack.c.b16 %v825, %v823
    %v898 = vpack.c.b16 %v826, %v824
    %v899 = vpack.c.b16 %v829, %v827
    %v900 = vpack.c.b16 %v830, %v828
    %v901 = vpack.c.b16 %v833, %v831
    %v902 = vpack.c.b16 %v834, %v832
    %v903 = vpack.c.b16 %v837, %v835
    %v904 = vpack.c.b16 %v838, %v836
    %v905 = vpack.c.b16 %v841, %v839
    %v906 = vpack.c.b16 %v842, %v840
    %971 = vmatpush.bf16.msra.mxu0 %v857
    %972 = vmatpush.bf16.msra.mxu0 %v855
    %973 = vmatpush.bf16.msra.mxu0 %v853
    %974 = vmatpush.bf16.msra.mxu0 %v851
    %975 = vmatpush.bf16.msra.mxu0 %v849
    %976 = vmatpush.bf16.msra.mxu0 %v847
    %977 = vmatpush.bf16.msra.mxu0 %v845
    %978 = vmatpush.bf16.msra.mxu0 %v843
    %979 = vmatmul.bf16.gmra.mxu0 %v581
    %v980 = vpop.f32.mrf.mxu0
    %v981 = vadd.f32 %v649, %v980
    %v982 = vpop.f32.mrf.mxu0
    %983 = vdwg.mxu0
    %984 = vmatpush.bf16.msra.mxu0 %v873
    %985 = vmatpush.bf16.msra.mxu0 %v871
    %986 = vmatpush.bf16.msra.mxu0 %v869
    %987 = vmatpush.bf16.msra.mxu0 %v867
    %988 = vmatpush.bf16.msra.mxu0 %v865
    %989 = vmatpush.bf16.msra.mxu0 %v863
    %990 = vmatpush.bf16.msra.mxu0 %v861
    %991 = vmatpush.bf16.msra.mxu0 %v859
    %992 = vmatmul.bf16.gmra.mxu0 %v582
    %v993 = vpop.f32.mrf.mxu0
    %v994 = vadd.f32 %v981, %v993
    %v995 = vpop.f32.mrf.mxu0
    %996 = vdwg.mxu0
    %997 = vmatpush.bf16.msra.mxu0 %v889
    %998 = vmatpush.bf16.msra.mxu0 %v887
    %999 = vmatpush.bf16.msra.mxu0 %v885
    %1000 = vmatpush.bf16.msra.mxu0 %v883
    %1001 = vmatpush.bf16.msra.mxu0 %v881
    %1002 = vmatpush.bf16.msra.mxu0 %v879
    %1003 = vmatpush.bf16.msra.mxu0 %v877
    %1004 = vmatpush.bf16.msra.mxu0 %v875
    %1005 = vmatmul.bf16.gmra.mxu0 %v583
    %v1006 = vpop.f32.mrf.mxu0
    %v1007 = vadd.f32 %v994, %v1006
    %v1008 = vpop.f32.mrf.mxu0
    %1009 = vdwg.mxu0
    %1010 = vmatpush.bf16.msra.mxu0 %v905
    %1011 = vmatpush.bf16.msra.mxu0 %v903
    %1012 = vmatpush.bf16.msra.mxu0 %v901
    %1013 = vmatpush.bf16.msra.mxu0 %v899
    %1014 = vmatpush.bf16.msra.mxu0 %v897
    %1015 = vmatpush.bf16.msra.mxu0 %v895
    %1016 = vmatpush.bf16.msra.mxu0 %v893
    %1017 = vmatpush.bf16.msra.mxu0 %v891
    %1018 = vmatmul.bf16.gmra.mxu0 %v584
    %v1019 = vpop.f32.mrf.mxu0
    %v1020 = vadd.f32 %v1007, %v1019
    %v1021 = vpop.f32.mrf.mxu0
    %1022 = vdwg.mxu0
    %1023 = vmatpush.bf16.msra.mxu0 %v858
    %1024 = vmatpush.bf16.msra.mxu0 %v856
    %1025 = vmatpush.bf16.msra.mxu0 %v854
    %1026 = vmatpush.bf16.msra.mxu0 %v852
    %1027 = vmatpush.bf16.msra.mxu0 %v850
    %1028 = vmatpush.bf16.msra.mxu0 %v848
    %1029 = vmatpush.bf16.msra.mxu0 %v846
    %1030 = vmatpush.bf16.msra.mxu0 %v844
    %1031 = vmatmul.bf16.gmra.mxu0 %v581
    %v1032 = vpop.f32.mrf.mxu0
    %v1033 = vadd.f32 %v650, %v1032
    %v1034 = vpop.f32.mrf.mxu0
    %1035 = vdwg.mxu0
    %1036 = vmatpush.bf16.msra.mxu0 %v874
    %1037 = vmatpush.bf16.msra.mxu0 %v872
    %1038 = vmatpush.bf16.msra.mxu0 %v870
    %1039 = vmatpush.bf16.msra.mxu0 %v868
    %1040 = vmatpush.bf16.msra.mxu0 %v866
    %1041 = vmatpush.bf16.msra.mxu0 %v864
    %1042 = vmatpush.bf16.msra.mxu0 %v862
    %1043 = vmatpush.bf16.msra.mxu0 %v860
    %1044 = vmatmul.bf16.gmra.mxu0 %v582
    %v1045 = vpop.f32.mrf.mxu0
    %v1046 = vadd.f32 %v1033, %v1045
    %v1047 = vpop.f32.mrf.mxu0
    %1048 = vdwg.mxu0
    %1049 = vmatpush.bf16.msra.mxu0 %v890
    %1050 = vmatpush.bf16.msra.mxu0 %v888
    %1051 = vmatpush.bf16.msra.mxu0 %v886
    %1052 = vmatpush.bf16.msra.mxu0 %v884
    %1053 = vmatpush.bf16.msra.mxu0 %v882
    %1054 = vmatpush.bf16.msra.mxu0 %v880
    %1055 = vmatpush.bf16.msra.mxu0 %v878
    %1056 = vmatpush.bf16.msra.mxu0 %v876
    %1057 = vmatmul.bf16.gmra.mxu0 %v583
    %v1058 = vpop.f32.mrf.mxu0
    %v1059 = vadd.f32 %v1046, %v1058
    %v1060 = vpop.f32.mrf.mxu0
    %1061 = vdwg.mxu0
    %1062 = vmatpush.bf16.msra.mxu0 %v906
    %1063 = vmatpush.bf16.msra.mxu0 %v904
    %1064 = vmatpush.bf16.msra.mxu0 %v902
    %1065 = vmatpush.bf16.msra.mxu0 %v900
    %1066 = vmatpush.bf16.msra.mxu0 %v898
    %1067 = vmatpush.bf16.msra.mxu0 %v896
    %1068 = vmatpush.bf16.msra.mxu0 %v894
    %1069 = vmatpush.bf16.msra.mxu0 %v892
    %1070 = vmatmul.bf16.gmra.mxu0 %v584
    %v1071 = vpop.f32.mrf.mxu0
    %v1072 = vadd.f32 %v1059, %v1071
    %v1073 = vpop.f32.mrf.mxu0
    %1074 = vdwg.mxu0
    %v1075 = vmax.f32 %v1020, 0.0
    %v1076 = vmax.f32 %v1072, 0.0
    %v1077 = vpack.c.bf16 %v1075, %v1075
    %v1078 = vpack.c.bf16 %v1076, %v1076
    %v1079 = vld [vmem:[#allocation2 + $0x620] sm:$0xf]
    %v1080 = vld [vmem:[#allocation2 + $0x630] sm:$0xf]
    %v1081 = vld [vmem:[#allocation2 + $0x640] sm:$0xf]
    %v1082 = vld [vmem:[#allocation2 + $0x650] sm:$0xf]
    %v1083 = vld [vmem:[#allocation2 + $0x660] sm:$0xf]
    %v1084 = vld [vmem:[#allocation2 + $0x670] sm:$0xf]
    %v1085 = vld [vmem:[#allocation2 + $0x680] sm:$0xf]
    %v1086 = vld [vmem:[#allocation2 + $0x690] sm:$0xf]
    %v1087 = vld [vmem:[#allocation2 + $0x6a0] sm:$0xf]
    %v1088 = vld [vmem:[#allocation2 + $0x6b0] sm:$0xf]
    %v1089 = vld [vmem:[#allocation2 + $0x6c0] sm:$0xf]
    %v1090 = vld [vmem:[#allocation2 + $0x6d0] sm:$0xf]
    %v1091 = vld [vmem:[#allocation2 + $0x6e0] sm:$0xf]
    %v1092 = vld [vmem:[#allocation2 + $0x6f0] sm:$0xf]
    %v1093 = vld [vmem:[#allocation2 + $0x700] sm:$0xf]
    %v1094 = vld [vmem:[#allocation2 + $0x710] sm:$0xf]
    %v1095 = vld [vmem:[#allocation2 + $0x720] sm:$0xf]
    %v1096 = vld [vmem:[#allocation2 + $0x730] sm:$0xf]
    %v1097 = vld [vmem:[#allocation2 + $0x740] sm:$0xf]
    %v1098 = vld [vmem:[#allocation2 + $0x750] sm:$0xf]
    %v1099 = vld [vmem:[#allocation2 + $0x760] sm:$0xf]
    %v1100 = vld [vmem:[#allocation2 + $0x770] sm:$0xf]
    %v1101 = vld [vmem:[#allocation2 + $0x780] sm:$0xf]
    %v1102 = vld [vmem:[#allocation2 + $0x790] sm:$0xf]
    %v1103 = vld [vmem:[#allocation2 + $0x7a0] sm:$0xf]
    %v1104 = vld [vmem:[#allocation2 + $0x7b0] sm:$0xf]
    %v1105 = vld [vmem:[#allocation2 + $0x7c0] sm:$0xf]
    %v1106 = vld [vmem:[#allocation2 + $0x7d0] sm:$0xf]
    %v1107 = vld [vmem:[#allocation2 + $0x7e0] sm:$0xf]
    %v1108 = vld [vmem:[#allocation2 + $0x7f0] sm:$0xf]
    %v1109 = vld [vmem:[#allocation2 + $0x800] sm:$0xf]
    %v1110 = vld [vmem:[#allocation2 + $0x810] sm:$0xf]
    %v1111 = vperm.slane %v31, 3
    %v1144 = vunpack.c.l.b16 %v1079
    %v1145 = vunpack.c.l.b16 %v1080
    %v1146 = vunpack.c.l.b16 %v1081
    %v1147 = vunpack.c.l.b16 %v1082
    %v1148 = vunpack.c.l.b16 %v1083
    %v1149 = vunpack.c.l.b16 %v1084
    %v1150 = vunpack.c.l.b16 %v1085
    %v1151 = vunpack.c.l.b16 %v1086
    %v1152 = vunpack.c.l.b16 %v1087
    %v1153 = vunpack.c.l.b16 %v1088
    %v1154 = vunpack.c.l.b16 %v1089
    %v1155 = vunpack.c.l.b16 %v1090
    %v1156 = vunpack.c.l.b16 %v1091
    %v1157 = vunpack.c.l.b16 %v1092
    %v1158 = vunpack.c.l.b16 %v1093
    %v1159 = vunpack.c.l.b16 %v1094
    %v1160 = vunpack.c.l.b16 %v1095
    %v1161 = vunpack.c.l.b16 %v1096
    %v1162 = vunpack.c.l.b16 %v1097
    %v1163 = vunpack.c.l.b16 %v1098
    %v1164 = vunpack.c.l.b16 %v1099
    %v1165 = vunpack.c.l.b16 %v1100
    %v1166 = vunpack.c.l.b16 %v1101
    %v1167 = vunpack.c.l.b16 %v1102
    %v1168 = vunpack.c.l.b16 %v1103
    %v1169 = vunpack.c.l.b16 %v1104
    %v1170 = vunpack.c.l.b16 %v1105
    %v1171 = vunpack.c.l.b16 %v1106
    %v1172 = vunpack.c.l.b16 %v1107
    %v1173 = vunpack.c.l.b16 %v1108
    %v1174 = vunpack.c.l.b16 %v1109
    %v1175 = vunpack.c.l.b16 %v1110
    %v1176 = vpack.c.b16 %v1145, %v1144
    %v1177 = vpack.c.b16 %v1147, %v1146
    %v1178 = vpack.c.b16 %v1149, %v1148
    %v1179 = vpack.c.b16 %v1151, %v1150
    %v1180 = vpack.c.b16 %v1153, %v1152
    %v1181 = vpack.c.b16 %v1155, %v1154
    %v1182 = vpack.c.b16 %v1157, %v1156
    %v1183 = vpack.c.b16 %v1159, %v1158
    %v1184 = vpack.c.b16 %v1161, %v1160
    %v1185 = vpack.c.b16 %v1163, %v1162
    %v1186 = vpack.c.b16 %v1165, %v1164
    %v1187 = vpack.c.b16 %v1167, %v1166
    %v1188 = vpack.c.b16 %v1169, %v1168
    %v1189 = vpack.c.b16 %v1171, %v1170
    %v1190 = vpack.c.b16 %v1173, %v1172
    %v1191 = vpack.c.b16 %v1175, %v1174
    %1208 = vmatpush.bf16.msra.mxu0 %v1183
    %1209 = vmatpush.bf16.msra.mxu0 %v1182
    %1210 = vmatpush.bf16.msra.mxu0 %v1181
    %1211 = vmatpush.bf16.msra.mxu0 %v1180
    %1212 = vmatpush.bf16.msra.mxu0 %v1179
    %1213 = vmatpush.bf16.msra.mxu0 %v1178
    %1214 = vmatpush.bf16.msra.mxu0 %v1177
    %1215 = vmatpush.bf16.msra.mxu0 %v1176
    %1216 = vmatmul.bf16.gmra.mxu0 %v1077
    %v1217 = vpop.f32.mrf.mxu0
    %v1218 = vadd.f32 %v1111, %v1217
    %v1219 = vpop.f32.mrf.mxu0
    %1220 = vdwg.mxu0
    %1221 = vmatpush.bf16.msra.mxu0 %v1191
    %1222 = vmatpush.bf16.msra.mxu0 %v1190
    %1223 = vmatpush.bf16.msra.mxu0 %v1189
    %1224 = vmatpush.bf16.msra.mxu0 %v1188
    %1225 = vmatpush.bf16.msra.mxu0 %v1187
    %1226 = vmatpush.bf16.msra.mxu0 %v1186
    %1227 = vmatpush.bf16.msra.mxu0 %v1185
    %1228 = vmatpush.bf16.msra.mxu0 %v1184
    %1229 = vmatmul.bf16.gmra.mxu0 %v1078
    %v1230 = vpop.f32.mrf.mxu0
    %v1231 = vadd.f32 %v1218, %v1230
    %v1232 = vpop.f32.mrf.mxu0
    %1233 = vdwg.mxu0
    %1234 = vst [vmem:[%s3] sm:$0xff] %v1231
    // Predicated region
    $region18: #{_lambda_.1} parent=1 // pred_check
      _
    $region19: #{_lambda_.1} parent=1 // pred_check_branch
      %1236 = sbr.rel (0) target = $region21
    $region20: #{_lambda_.1} parent=1 // pred_region
      _
    $region21: #{_lambda_.1} parent=1 // pred_fallthru
      _
    // Predicated region
    $region22: #{_lambda_.1} parent=1 // pred_check
      _
    $region23: #{_lambda_.1} parent=1 // pred_check_branch
      %1238 = sbr.rel (0) target = $region25
    $region24: #{_lambda_.1} parent=1 // pred_region
      _
    $region25: #{_lambda_.1} parent=1 // pred_fallthru
      _
    %1239 = vsyncpa [#allocation3], 1

</llo_original>
